<compile_context>
chip_gen: v7x
topology: tpu7x:2x2x1
jax: 0.10.0
libtpu: 0.0.40
codegen_flags: <defaults>
</compile_context>

<pallas_src>
import functools

import jax
import jax.numpy as jnp
from jax.experimental import pallas as pl
from jax.experimental.pallas import tpu as pltpu

IN_H, IN_W, IN_C = 7, 7, 3
FLAT = IN_H * IN_W * IN_C        # 147
HID = 196
OUT = 4

HID_PAD = 256                    # 196 padded up to a 128-multiple (lane dim)
MAX_TB = 2048                    # batch tile upper bound


def _round_up(n, m):
    return ((n + m - 1) // m) * m


def _choose_tb(batch):
    """Batch tile: multiple of 8, >=2 grid steps once B >= 16 (v7x megacore)."""
    if batch >= 16:
        tb = _round_up((batch + 1) // 2, 8)
    else:
        tb = _round_up(max(batch, 1), 8)
    return min(MAX_TB, tb)


def _madqn_kernel(x_ref, w1_ref, b1_ref, w2_ref, b2_ref, w3_ref, b3_ref, o_ref):
    # x tile: (TB, 147) f32 -> bf16 for the MXU; accumulate in f32.
    x = x_ref[...].astype(jnp.bfloat16)
    h1 = jnp.dot(x, w1_ref[...], preferred_element_type=jnp.float32) + b1_ref[...]
    h1 = jnp.maximum(h1, 0.0).astype(jnp.bfloat16)
    h2 = jnp.dot(h1, w2_ref[...], preferred_element_type=jnp.float32) + b2_ref[...]
    h2 = jnp.maximum(h2, 0.0).astype(jnp.bfloat16)
    o_ref[...] = jnp.dot(h2, w3_ref[...], preferred_element_type=jnp.float32) + b3_ref[...]


def prepare_params(params):
    """One-time (outside jit) padding + bf16 cast of the parameters.

    Raw params: w (in_features, out_features) f32, b (1, out_features) f32.
    Padded:
      w1: (147, 256) bf16   b1: (1, 256) f32
      w2: (256, 256) bf16   b2: (1, 256) f32
      w3: (256,   4) bf16   b3: (1,   4) f32
    Zero padding keeps the extra hidden lanes exactly 0 through bias+ReLU.
    """
    w1, b1, w2, b2, w3, b3 = params
    w1p = jnp.zeros((FLAT, HID_PAD), jnp.float32).at[:, :HID].set(w1).astype(jnp.bfloat16)
    b1p = jnp.zeros((1, HID_PAD), jnp.float32).at[:, :HID].set(b1)
    w2p = jnp.zeros((HID_PAD, HID_PAD), jnp.float32).at[:HID, :HID].set(w2).astype(jnp.bfloat16)
    b2p = jnp.zeros((1, HID_PAD), jnp.float32).at[:, :HID].set(b2)
    w3p = jnp.zeros((HID_PAD, OUT), jnp.float32).at[:HID, :].set(w3).astype(jnp.bfloat16)
    b3p = b3.astype(jnp.float32)
    return w1p, b1p, w2p, b2p, w3p, b3p


@jax.jit
def madqn_forward(x, prepped_params):
    """x: (B, 7, 7, 3) float32. prepped_params: output of prepare_params.

    Returns Q-values (B, 4) float32."""
    w1p, b1p, w2p, b2p, w3p, b3p = prepped_params
    B = x.shape[0]
    x2d = x.reshape(B, FLAT).astype(jnp.float32)             # (B, 147), no padding copy

    TB = _choose_tb(B)
    grid = (pl.cdiv(B, TB),)

    const = lambda i: (0, 0)      # weights / biases stay VMEM-resident across the grid

    flops = 2 * B * (FLAT * HID + HID * HID + HID * OUT)
    bytes_accessed = (4 * B * (FLAT + OUT)                                   # x in, q out
                      + 2 * (FLAT * HID_PAD + HID_PAD * HID_PAD + HID_PAD * OUT)  # bf16 weights
                      + 4 * (2 * HID_PAD + OUT))                             # f32 biases

    out = pl.pallas_call(
        _madqn_kernel,
        out_shape=jax.ShapeDtypeStruct((B, OUT), jnp.float32),
        grid_spec=pltpu.PrefetchScalarGridSpec(
            num_scalar_prefetch=0,
            grid=grid,
            in_specs=[
                pl.BlockSpec((TB, FLAT), lambda i: (i, 0)),       # streamed activations
                pl.BlockSpec((FLAT, HID_PAD), const),             # resident bf16 weights
                pl.BlockSpec((1, HID_PAD), const),
                pl.BlockSpec((HID_PAD, HID_PAD), const),
                pl.BlockSpec((1, HID_PAD), const),
                pl.BlockSpec((HID_PAD, OUT), const),
                pl.BlockSpec((1, OUT), const),
            ],
            out_specs=pl.BlockSpec((TB, OUT), lambda i: (i, 0)),  # narrow (B,4) writeback
        ),
        compiler_params=pltpu.CompilerParams(
            dimension_semantics=("parallel",),
            vmem_limit_bytes=32 * 1024 * 1024,
        ),
        cost_estimate=pl.CostEstimate(
            flops=flops, transcendentals=0, bytes_accessed=bytes_accessed),
    )(x2d, w1p, b1p, w2p, b2p, w3p, b3p)

    return out


def init_params(key):
    """Deterministic PyTorch-style Linear init: U(-1/sqrt(fan_in), 1/sqrt(fan_in)).

    Weights are stored transposed, i.e. (in_features, out_features)."""
    ks = jax.random.split(key, 6)

    def linear(kw, kb, fan_in, fan_out):
        bound = 1.0 / jnp.sqrt(jnp.float32(fan_in))
        w = jax.random.uniform(kw, (fan_in, fan_out), jnp.float32, -bound, bound)
        b = jax.random.uniform(kb, (1, fan_out), jnp.float32, -bound, bound)
        return w, b

    w1, b1 = linear(ks[0], ks[1], FLAT, HID)
    w2, b2 = linear(ks[2], ks[3], HID, HID)
    w3, b3 = linear(ks[4], ks[5], HID, OUT)
    return (w1, b1, w2, b2, w3, b3)


def _reference_forward(x, params):
    """Plain-JAX f32 reference for correctness checking."""
    w1, b1, w2, b2, w3, b3 = params
    h = x.reshape(x.shape[0], -1).astype(jnp.float32)
    h = jnp.maximum(h @ w1 + b1, 0.0)
    h = jnp.maximum(h @ w2 + b2, 0.0)
    return h @ w3 + b3


if __name__ == "__main__":
    key = jax.random.PRNGKey(0)
    k_x, k_p = jax.random.split(key)

    params = init_params(k_p)
    prepped = jax.block_until_ready(prepare_params(params))   # one-time, outside jit

    # Small batch.
    B = 8
    x = jax.random.normal(k_x, (B, IN_H, IN_W, IN_C), dtype=jnp.float32)
    out = jax.block_until_ready(madqn_forward(x, prepped))
    ref = _reference_forward(x, params)
    assert out.shape == (B, OUT), out.shape
    # bf16 matmul inputs (f32 accumulation) -> loosened tolerance vs f32 reference.
    assert jnp.allclose(out, ref, atol=3e-2, rtol=3e-2), "mismatch vs reference"

    # Batch that is not a tile multiple: exercises the ragged cdiv-grid edge block.
    B2 = 37
    x2 = jax.random.normal(k_x, (B2, IN_H, IN_W, IN_C), dtype=jnp.float32)
    out2 = jax.block_until_ready(madqn_forward(x2, prepped))
    ref2 = _reference_forward(x2, params)
    assert out2.shape == (B2, OUT), out2.shape
    assert jnp.allclose(out2, ref2, atol=3e-2, rtol=3e-2), "mismatch vs reference (B=37)"

    print("KERNEL_OK")
</pallas_src>

<mosaic_0001>
module attributes {stable_mosaic.version = 11 : i64} {
  func.func @_madqn_kernel(%arg0: i32, %arg1: memref<8x147xf32, #tpu.memory_space<vmem>>, %arg2: memref<147x256xbf16, #tpu.memory_space<vmem>>, %arg3: memref<1x256xf32, #tpu.memory_space<vmem>>, %arg4: memref<256x256xbf16, #tpu.memory_space<vmem>>, %arg5: memref<1x256xf32, #tpu.memory_space<vmem>>, %arg6: memref<256x4xbf16, #tpu.memory_space<vmem>>, %arg7: memref<1x4xf32, #tpu.memory_space<vmem>>, %arg8: memref<8x4xf32, #tpu.memory_space<vmem>>) attributes {dimension_semantics = [#tpu.dimension_semantics<parallel>], iteration_bounds = array<i64: 1>, scalar_prefetch = 0 : i64, scratch_operands = 0 : i64, tpu.core_type = #tpu.core_type<tc>, window_params = [{transform_indices = @transform_0, window_bounds = array<i64: 8, 147>}, {pipeline_mode = #tpu.pipeline_mode<synchronous>, transform_indices = @transform_1, window_bounds = array<i64: 147, 256>}, {pipeline_mode = #tpu.pipeline_mode<synchronous>, transform_indices = @transform_2, window_bounds = array<i64: 1, 256>}, {pipeline_mode = #tpu.pipeline_mode<synchronous>, transform_indices = @transform_3, window_bounds = array<i64: 256, 256>}, {pipeline_mode = #tpu.pipeline_mode<synchronous>, transform_indices = @transform_4, window_bounds = array<i64: 1, 256>}, {pipeline_mode = #tpu.pipeline_mode<synchronous>, transform_indices = @transform_5, window_bounds = array<i64: 256, 4>}, {pipeline_mode = #tpu.pipeline_mode<synchronous>, transform_indices = @transform_6, window_bounds = array<i64: 1, 4>}, {transform_indices = @transform_7, window_bounds = array<i64: 8, 4>}]} {
    %c0 = arith.constant 0 : index
    %c0_0 = arith.constant 0 : index
    %0 = vector.load %arg1[%c0, %c0_0] : memref<8x147xf32, #tpu.memory_space<vmem>>, vector<8x147xf32>
    %1 = arith.truncf %0 : vector<8x147xf32> to vector<8x147xbf16>
    %c0_1 = arith.constant 0 : index
    %c0_2 = arith.constant 0 : index
    %2 = vector.load %arg2[%c0_1, %c0_2] : memref<147x256xbf16, #tpu.memory_space<vmem>>, vector<147x256xbf16>
    %cst = arith.constant dense<0.000000e+00> : vector<8x256xf32>
    %3 = tpu.matmul %1, %2, %cst {dimension_numbers = #tpu.dot_dimension_numbers<[1], [0], [0], [1], [0, 0, 1, 1], [], []>} : vector<8x147xbf16>, vector<147x256xbf16>, vector<8x256xf32> -> vector<8x256xf32>
    %c0_3 = arith.constant 0 : index
    %c0_4 = arith.constant 0 : index
    %4 = vector.load %arg3[%c0_3, %c0_4] : memref<1x256xf32, #tpu.memory_space<vmem>>, vector<1x256xf32>
    %5 = vector.broadcast %4 : vector<1x256xf32> to vector<8x256xf32>
    %6 = arith.addf %3, %5 : vector<8x256xf32>
    %cst_5 = arith.constant 0.000000e+00 : f32
    %7 = vector.broadcast %cst_5 : f32 to vector<8x256xf32>
    %8 = arith.maximumf %6, %7 : vector<8x256xf32>
    %9 = arith.truncf %8 : vector<8x256xf32> to vector<8x256xbf16>
    %c0_6 = arith.constant 0 : index
    %c0_7 = arith.constant 0 : index
    %10 = vector.load %arg4[%c0_6, %c0_7] : memref<256x256xbf16, #tpu.memory_space<vmem>>, vector<256x256xbf16>
    %cst_8 = arith.constant dense<0.000000e+00> : vector<8x256xf32>
    %11 = tpu.matmul %9, %10, %cst_8 {dimension_numbers = #tpu.dot_dimension_numbers<[1], [0], [0], [1], [0, 0, 1, 1], [], []>} : vector<8x256xbf16>, vector<256x256xbf16>, vector<8x256xf32> -> vector<8x256xf32>
    %c0_9 = arith.constant 0 : index
    %c0_10 = arith.constant 0 : index
    %12 = vector.load %arg5[%c0_9, %c0_10] : memref<1x256xf32, #tpu.memory_space<vmem>>, vector<1x256xf32>
    %13 = vector.broadcast %12 : vector<1x256xf32> to vector<8x256xf32>
    %14 = arith.addf %11, %13 : vector<8x256xf32>
    %cst_11 = arith.constant 0.000000e+00 : f32
    %15 = vector.broadcast %cst_11 : f32 to vector<8x256xf32>
    %16 = arith.maximumf %14, %15 : vector<8x256xf32>
    %17 = arith.truncf %16 : vector<8x256xf32> to vector<8x256xbf16>
    %c0_12 = arith.constant 0 : index
    %c0_13 = arith.constant 0 : index
    %18 = vector.load %arg6[%c0_12, %c0_13] : memref<256x4xbf16, #tpu.memory_space<vmem>>, vector<256x4xbf16>
    %cst_14 = arith.constant dense<0.000000e+00> : vector<8x4xf32>
    %19 = tpu.matmul %17, %18, %cst_14 {dimension_numbers = #tpu.dot_dimension_numbers<[1], [0], [0], [1], [0, 0, 1, 1], [], []>} : vector<8x256xbf16>, vector<256x4xbf16>, vector<8x4xf32> -> vector<8x4xf32>
    %c0_15 = arith.constant 0 : index
    %c0_16 = arith.constant 0 : index
    %20 = vector.load %arg7[%c0_15, %c0_16] : memref<1x4xf32, #tpu.memory_space<vmem>>, vector<1x4xf32>
    %21 = vector.broadcast %20 : vector<1x4xf32> to vector<8x4xf32>
    %22 = arith.addf %19, %21 : vector<8x4xf32>
    %c0_17 = arith.constant 0 : index
    %c0_18 = arith.constant 0 : index
    %23 = vector.load %arg8[%c0_17, %c0_18] : memref<8x4xf32, #tpu.memory_space<vmem>>, vector<8x4xf32>
    tpu.vector_store %arg8[%c0_17, %c0_18], %22 {strides = array<i32>} : memref<8x4xf32, #tpu.memory_space<vmem>>, vector<8x4xf32>,
    return
  }
  func.func @transform_0(%arg0: i32) -> (i32, i32) {
    %c0_i32 = arith.constant 0 : i32
    %c0_i32_0 = arith.constant 0 : i32
    return %arg0, %c0_i32 : i32, i32
  }
  func.func @transform_1(%arg0: i32) -> (i32, i32) {
    %c0_i32 = arith.constant 0 : i32
    %c0_i32_0 = arith.constant 0 : i32
    %c0_i32_1 = arith.constant 0 : i32
    return %c0_i32, %c0_i32_0 : i32, i32
  }
  func.func @transform_2(%arg0: i32) -> (i32, i32) {
    %c0_i32 = arith.constant 0 : i32
    %c0_i32_0 = arith.constant 0 : i32
    %c0_i32_1 = arith.constant 0 : i32
    return %c0_i32, %c0_i32_0 : i32, i32
  }
  func.func @transform_3(%arg0: i32) -> (i32, i32) {
    %c0_i32 = arith.constant 0 : i32
    %c0_i32_0 = arith.constant 0 : i32
    %c0_i32_1 = arith.constant 0 : i32
    return %c0_i32, %c0_i32_0 : i32, i32
  }
  func.func @transform_4(%arg0: i32) -> (i32, i32) {
    %c0_i32 = arith.constant 0 : i32
    %c0_i32_0 = arith.constant 0 : i32
    %c0_i32_1 = arith.constant 0 : i32
    return %c0_i32, %c0_i32_0 : i32, i32
  }
  func.func @transform_5(%arg0: i32) -> (i32, i32) {
    %c0_i32 = arith.constant 0 : i32
    %c0_i32_0 = arith.constant 0 : i32
    %c0_i32_1 = arith.constant 0 : i32
    return %c0_i32, %c0_i32_0 : i32, i32
  }
  func.func @transform_6(%arg0: i32) -> (i32, i32) {
    %c0_i32 = arith.constant 0 : i32
    %c0_i32_0 = arith.constant 0 : i32
    %c0_i32_1 = arith.constant 0 : i32
    return %c0_i32, %c0_i32_0 : i32, i32
  }
  func.func @transform_7(%arg0: i32) -> (i32, i32) {
    %c0_i32 = arith.constant 0 : i32
    %c0_i32_0 = arith.constant 0 : i32
    return %arg0, %c0_i32 : i32, i32
  }
}

</mosaic_0001>

<llo_original>
// kernel: madqn_forward.1
$region0: #{madqn_forward.1}
  #allocation0 [shape = 'u32[]', space=smem, size = 0x4, offset = 0x4, fixed_abs, tag = 'smem constant byte address 0x4 - core index']
  #allocation1 [shape = 'u32[144,128]{1,0:T(1,128)}', space=vmem, size = 0x12000, scoped, tag = 'internal scratch']
  %s0 = inlined_call_operand.vmem [shape: f32[8,147], index: 0, kind: input, shape index: {}]
  %s1 = inlined_call_operand.vmem [shape: bf16[147,256], index: 1, kind: input, shape index: {}]
  %s2 = inlined_call_operand.vmem [shape: f32[1,256], index: 2, kind: input, shape index: {}]
  %s3 = inlined_call_operand.vmem [shape: bf16[256,256], index: 3, kind: input, shape index: {}]
  %s4 = inlined_call_operand.vmem [shape: f32[1,256], index: 4, kind: input, shape index: {}]
  %s5 = inlined_call_operand.vmem [shape: bf16[256,4], index: 5, kind: input, shape index: {}]
  %s6 = inlined_call_operand.vmem [shape: f32[1,4], index: 6, kind: input, shape index: {}]
  %s7 = inlined_call_operand.vmem [shape: f32[8,4], index: 7, kind: output, shape index: {}]
  %s8 = sld [smem:[#allocation0]]
  $region38: #{madqn_forward.1} parent=0
    _
  %s10 = ssub.s32 1, %s8
  %s11 = scalar_select 0, %s10, %s8
  // Predicated region
  $region2: #{madqn_forward.1} parent=0 // pred_check
    _
  $region3: #{madqn_forward.1} parent=0 // pred_check_branch
    %13 = sbr.rel (0) target = $region5
  $region4: #{madqn_forward.1} parent=0 // pred_region
    _
  $region5: #{madqn_forward.1} parent=0 // pred_fallthru
    _
  // Predicated region
  $region6: #{madqn_forward.1} parent=0 // pred_check
    _
  $region7: #{madqn_forward.1} parent=0 // pred_check_branch
    %15 = sbr.rel (0) target = $region9
  $region8: #{madqn_forward.1} parent=0 // pred_region
    _
  $region9: #{madqn_forward.1} parent=0 // pred_fallthru
    _
  // Predicated region
  $region10: #{madqn_forward.1} parent=0 // pred_check
    _
  $region11: #{madqn_forward.1} parent=0 // pred_check_branch
    %17 = sbr.rel (0) target = $region13
  $region12: #{madqn_forward.1} parent=0 // pred_region
    _
  $region13: #{madqn_forward.1} parent=0 // pred_fallthru
    _
  // Predicated region
  $region14: #{madqn_forward.1} parent=0 // pred_check
    _
  $region15: #{madqn_forward.1} parent=0 // pred_check_branch
    %19 = sbr.rel (0) target = $region17
  $region16: #{madqn_forward.1} parent=0 // pred_region
    _
  $region17: #{madqn_forward.1} parent=0 // pred_fallthru
    _
  // Predicated region
  $region18: #{madqn_forward.1} parent=0 // pred_check
    _
  $region19: #{madqn_forward.1} parent=0 // pred_check_branch
    %21 = sbr.rel (0) target = $region21
  $region20: #{madqn_forward.1} parent=0 // pred_region
    _
  $region21: #{madqn_forward.1} parent=0 // pred_fallthru
    _
  // Predicated region
  $region22: #{madqn_forward.1} parent=0 // pred_check
    _
  $region23: #{madqn_forward.1} parent=0 // pred_check_branch
    %23 = sbr.rel (0) target = $region25
  $region24: #{madqn_forward.1} parent=0 // pred_region
    _
  $region25: #{madqn_forward.1} parent=0 // pred_fallthru
    _
  // Predicated region
  $region26: #{madqn_forward.1} parent=0 // pred_check
    _
  $region27: #{madqn_forward.1} parent=0 // pred_check_branch
    %25 = sbr.rel (0) target = $region29
  $region28: #{madqn_forward.1} parent=0 // pred_region
    _
  $region29: #{madqn_forward.1} parent=0 // pred_fallthru
    _
  %v27 = vld [vmem:[%s0] sm:$0xff]
  %v28 = vld [vmem:[%s0 + $0x8] sm:$0xff]
  %v29 = vpack.c.bf16 %v27, %v27
  %v30 = vpack.c.bf16 %v28, %v28
  %v31 = vld [vmem:[%s1] sm:$0xff]
  %v32 = vld [vmem:[%s1 + $0x8] sm:$0xff]
  %v33 = vld [vmem:[%s1 + $0x10] sm:$0xff]
  %v34 = vld [vmem:[%s1 + $0x18] sm:$0xff]
  %v35 = vld [vmem:[%s1 + $0x20] sm:$0xff]
  %v36 = vld [vmem:[%s1 + $0x28] sm:$0xff]
  %v37 = vld [vmem:[%s1 + $0x30] sm:$0xff]
  %v38 = vld [vmem:[%s1 + $0x38] sm:$0xff]
  %v39 = vld [vmem:[%s1 + $0x40] sm:$0xff]
  %v40 = vld [vmem:[%s1 + $0x48] sm:$0xff]
  %v41 = vld [vmem:[%s1 + $0x50] sm:$0xff]
  %v42 = vld [vmem:[%s1 + $0x58] sm:$0xff]
  %v43 = vld [vmem:[%s1 + $0x60] sm:$0xff]
  %v44 = vld [vmem:[%s1 + $0x68] sm:$0xff]
  %v45 = vld [vmem:[%s1 + $0x70] sm:$0xff]
  %v46 = vld [vmem:[%s1 + $0x78] sm:$0xff]
  %v47 = vld [vmem:[%s1 + $0x80] sm:$0xff]
  %v48 = vld [vmem:[%s1 + $0x88] sm:$0xff]
  %v49 = vld [vmem:[%s1 + $0x90] sm:$0x33]
  %v50 = vld [vmem:[%s2] sm:$0x3]
  %v52 = vlaneseq
  %v53 = vshrl.u32 %v52, 7
  %v54 = vsub.s32 0, %v53
  %v55 = vrot.slane %v50, %v54
  %v56 = vlaneseq
  %v57 = vshrl.u32 %v56, 7
  %v58 = vsub.s32 1, %v57
  %v59 = vrot.slane %v50, %v58
  %v81 = vunpack.c.l.b16 %v31
  %v82 = vunpack.c.h.b16 %v31
  %v83 = vunpack.c.l.b16 %v32
  %v84 = vunpack.c.h.b16 %v32
  %v85 = vunpack.c.l.b16 %v33
  %v86 = vunpack.c.h.b16 %v33
  %v87 = vunpack.c.l.b16 %v34
  %v88 = vunpack.c.h.b16 %v34
  %v89 = vunpack.c.l.b16 %v35
  %v90 = vunpack.c.h.b16 %v35
  %v91 = vunpack.c.l.b16 %v36
  %v92 = vunpack.c.h.b16 %v36
  %v93 = vunpack.c.l.b16 %v37
  %v94 = vunpack.c.h.b16 %v37
  %v95 = vunpack.c.l.b16 %v38
  %v96 = vunpack.c.h.b16 %v38
  %v97 = vunpack.c.l.b16 %v39
  %v98 = vunpack.c.h.b16 %v39
  %v99 = vunpack.c.l.b16 %v40
  %v100 = vunpack.c.h.b16 %v40
  %v101 = vunpack.c.l.b16 %v41
  %v102 = vunpack.c.h.b16 %v41
  %v103 = vunpack.c.l.b16 %v42
  %v104 = vunpack.c.h.b16 %v42
  %v105 = vunpack.c.l.b16 %v43
  %v106 = vunpack.c.h.b16 %v43
  %v107 = vunpack.c.l.b16 %v44
  %v108 = vunpack.c.h.b16 %v44
  %v109 = vunpack.c.l.b16 %v45
  %v110 = vunpack.c.h.b16 %v45
  %v111 = vunpack.c.l.b16 %v46
  %v112 = vunpack.c.h.b16 %v46
  %v113 = vunpack.c.l.b16 %v47
  %v114 = vunpack.c.h.b16 %v47
  %v115 = vunpack.c.l.b16 %v48
  %v116 = vunpack.c.h.b16 %v48
  %v117 = vunpack.c.l.b16 %v49
  %v118 = vunpack.c.h.b16 %v49
  %v119 = vpack.c.b16 %v83, %v81
  %v120 = vpack.c.b16 %v84, %v82
  %v121 = vpack.c.b16 %v87, %v85
  %v122 = vpack.c.b16 %v88, %v86
  %v123 = vpack.c.b16 %v91, %v89
  %v124 = vpack.c.b16 %v92, %v90
  %v125 = vpack.c.b16 %v95, %v93
  %v126 = vpack.c.b16 %v96, %v94
  %v127 = vpack.c.b16 %v99, %v97
  %v128 = vpack.c.b16 %v100, %v98
  %v129 = vpack.c.b16 %v103, %v101
  %v130 = vpack.c.b16 %v104, %v102
  %v131 = vpack.c.b16 %v107, %v105
  %v132 = vpack.c.b16 %v108, %v106
  %v133 = vpack.c.b16 %v111, %v109
  %v134 = vpack.c.b16 %v112, %v110
  %v135 = vpack.c.b16 %v115, %v113
  %v136 = vpack.c.b16 %v116, %v114
  %v137 = vpack.c.b16 %v117, %v117
  %v138 = vpack.c.b16 %v118, %v118
  %vm157 = vcmask 154624
  %v159 = vsel %vm157, %v30, 0
  %vm161 = vcmask 1040384
  %vm162 = vcmask 1041408
  %v163 = vsel %vm161, 4294967295, 65535
  %v164 = vsel %vm162, %v163, 0
  %v166 = vand.u32 %v137, %v164
  %v169 = vand.u32 %v138, %v164
  %171 = vmatprep.subr.bf16.mxu0 %v120
  %172 = vmatpush1.bf16.msra.mxu0 %v119
  %173 = vmatprep.subr.bf16.mxu0 %v122
  %174 = vmatpush1.bf16.msra.mxu0 %v121
  %175 = vmatprep.subr.bf16.mxu0 %v124
  %176 = vmatpush1.bf16.msra.mxu0 %v123
  %177 = vmatprep.subr.bf16.mxu0 %v126
  %178 = vmatpush1.bf16.msra.mxu0 %v125
  %179 = vmatprep.subr.bf16.mxu0 %v128
  %180 = vmatpush1.bf16.msra.mxu0 %v127
  %181 = vmatprep.subr.bf16.mxu0 %v130
  %182 = vmatpush1.bf16.msra.mxu0 %v129
  %183 = vmatprep.subr.bf16.mxu0 %v132
  %184 = vmatpush1.bf16.msra.mxu0 %v131
  %185 = vmatprep.subr.bf16.mxu0 %v134
  %186 = vmatpush1.bf16.msra.mxu0 %v133
  %187 = vmatprep.subr.bf16.mxu0 %v136
  %188 = vmatpush1.bf16.msra.mxu0 %v135
  %189 = vmatprep.subr.bf16.mxu0 %v169
  %190 = vmatpush1.bf16.msra.mxu0 %v166
  %191 = vmatprep.subr.bf16.mxu0 0
  %192 = vmatpush1.bf16.msra.mxu0 0
  %193 = vmatprep.subr.bf16.mxu0 0
  %194 = vmatpush1.bf16.msra.mxu0 0
  %195 = vmatprep.subr.bf16.mxu0 0
  %196 = vmatpush1.bf16.msra.mxu0 0
  %197 = vmatprep.subr.bf16.mxu0 0
  %198 = vmatpush1.bf16.msra.mxu0 0
  %199 = vmatprep.subr.bf16.mxu0 0
  %200 = vmatpush1.bf16.msra.mxu0 0
  %201 = vmatprep.subr.bf16.mxu0 0
  %202 = vmatpush1.bf16.msra.mxu0 0
  %203 = vmatprep.mubr.bf16.mxu0 %v159
  %204 = vmatmul.mubr.bf16.gmra.mrb[0].mxu0 %v29
  %v205 = vpop.f32.mrb[0].mxu0
  %v206 = vadd.f32 %v55, %v205
  %v207 = vpop.f32.mrb[0].mxu0
  %v208 = vadd.f32 %v59, %v207
  %v209 = vpop.f32.mrb[0].mxu0
  %v210 = vpop.f32.mrb[0].mxu0
  %211 = vdwg.mxu0
  %v212 = vmax.f32 %v206, 0.0
  %v213 = vmax.f32 %v208, 0.0
  %v214 = vpack.c.bf16 %v212, %v212
  %v215 = vpack.c.bf16 %v213, %v213
  %v216 = vld [vmem:[%s3] sm:$0xff]
  %v217 = vld [vmem:[%s3 + $0x8] sm:$0xff]
  %v218 = vld [vmem:[%s3 + $0x10] sm:$0xff]
  %v219 = vld [vmem:[%s3 + $0x18] sm:$0xff]
  %v220 = vld [vmem:[%s3 + $0x20] sm:$0xff]
  %v221 = vld [vmem:[%s3 + $0x28] sm:$0xff]
  %v222 = vld [vmem:[%s3 + $0x30] sm:$0xff]
  %v223 = vld [vmem:[%s3 + $0x38] sm:$0xff]
  %v224 = vld [vmem:[%s3 + $0x40] sm:$0xff]
  %v225 = vld [vmem:[%s3 + $0x48] sm:$0xff]
  %v226 = vld [vmem:[%s3 + $0x50] sm:$0xff]
  %v227 = vld [vmem:[%s3 + $0x58] sm:$0xff]
  %v228 = vld [vmem:[%s3 + $0x60] sm:$0xff]
  %v229 = vld [vmem:[%s3 + $0x68] sm:$0xff]
  %v230 = vld [vmem:[%s3 + $0x70] sm:$0xff]
  %v231 = vld [vmem:[%s3 + $0x78] sm:$0xff]
  %v232 = vld [vmem:[%s3 + $0x80] sm:$0xff]
  %v233 = vld [vmem:[%s3 + $0x88] sm:$0xff]
  %v234 = vld [vmem:[%s3 + $0x90] sm:$0xff]
  %v235 = vld [vmem:[%s3 + $0x98] sm:$0xff]
  %v236 = vld [vmem:[%s3 + $0xa0] sm:$0xff]
  %v237 = vld [vmem:[%s3 + $0xa8] sm:$0xff]
  %v238 = vld [vmem:[%s3 + $0xb0] sm:$0xff]
  %v239 = vld [vmem:[%s3 + $0xb8] sm:$0xff]
  %v240 = vld [vmem:[%s3 + $0xc0] sm:$0xff]
  %v241 = vld [vmem:[%s3 + $0xc8] sm:$0xff]
  %v242 = vld [vmem:[%s3 + $0xd0] sm:$0xff]
  %v243 = vld [vmem:[%s3 + $0xd8] sm:$0xff]
  %v244 = vld [vmem:[%s3 + $0xe0] sm:$0xff]
  %v245 = vld [vmem:[%s3 + $0xe8] sm:$0xff]
  %v246 = vld [vmem:[%s3 + $0xf0] sm:$0xff]
  %v247 = vld [vmem:[%s3 + $0xf8] sm:$0xff]
  %v248 = vld [vmem:[%s4] sm:$0x3]
  %v250 = vlaneseq
  %v251 = vshrl.u32 %v250, 7
  %v252 = vsub.s32 0, %v251
  %v253 = vrot.slane %v248, %v252
  %v254 = vlaneseq
  %v255 = vshrl.u32 %v254, 7
  %v256 = vsub.s32 1, %v255
  %v257 = vrot.slane %v248, %v256
  %v292 = vunpack.c.l.b16 %v216
  %v293 = vunpack.c.h.b16 %v216
  %v294 = vunpack.c.l.b16 %v217
  %v295 = vunpack.c.h.b16 %v217
  %v296 = vunpack.c.l.b16 %v218
  %v297 = vunpack.c.h.b16 %v218
  %v298 = vunpack.c.l.b16 %v219
  %v299 = vunpack.c.h.b16 %v219
  %v300 = vunpack.c.l.b16 %v220
  %v301 = vunpack.c.h.b16 %v220
  %v302 = vunpack.c.l.b16 %v221
  %v303 = vunpack.c.h.b16 %v221
  %v304 = vunpack.c.l.b16 %v222
  %v305 = vunpack.c.h.b16 %v222
  %v306 = vunpack.c.l.b16 %v223
  %v307 = vunpack.c.h.b16 %v223
  %v308 = vunpack.c.l.b16 %v224
  %v309 = vunpack.c.h.b16 %v224
  %v310 = vunpack.c.l.b16 %v225
  %v311 = vunpack.c.h.b16 %v225
  %v312 = vunpack.c.l.b16 %v226
  %v313 = vunpack.c.h.b16 %v226
  %v314 = vunpack.c.l.b16 %v227
  %v315 = vunpack.c.h.b16 %v227
  %v316 = vunpack.c.l.b16 %v228
  %v317 = vunpack.c.h.b16 %v228
  %v318 = vunpack.c.l.b16 %v229
  %v319 = vunpack.c.h.b16 %v229
  %v320 = vunpack.c.l.b16 %v230
  %v321 = vunpack.c.h.b16 %v230
  %v322 = vunpack.c.l.b16 %v231
  %v323 = vunpack.c.h.b16 %v231
  %v324 = vunpack.c.l.b16 %v232
  %v325 = vunpack.c.h.b16 %v232
  %v326 = vunpack.c.l.b16 %v233
  %v327 = vunpack.c.h.b16 %v233
  %v328 = vunpack.c.l.b16 %v234
  %v329 = vunpack.c.h.b16 %v234
  %v330 = vunpack.c.l.b16 %v235
  %v331 = vunpack.c.h.b16 %v235
  %v332 = vunpack.c.l.b16 %v236
  %v333 = vunpack.c.h.b16 %v236
  %v334 = vunpack.c.l.b16 %v237
  %v335 = vunpack.c.h.b16 %v237
  %v336 = vunpack.c.l.b16 %v238
  %v337 = vunpack.c.h.b16 %v238
  %v338 = vunpack.c.l.b16 %v239
  %v339 = vunpack.c.h.b16 %v239
  %v340 = vunpack.c.l.b16 %v240
  %v341 = vunpack.c.h.b16 %v240
  %v342 = vunpack.c.l.b16 %v241
  %v343 = vunpack.c.h.b16 %v241
  %v344 = vunpack.c.l.b16 %v242
  %v345 = vunpack.c.h.b16 %v242
  %v346 = vunpack.c.l.b16 %v243
  %v347 = vunpack.c.h.b16 %v243
  %v348 = vunpack.c.l.b16 %v244
  %v349 = vunpack.c.h.b16 %v244
  %v350 = vunpack.c.l.b16 %v245
  %v351 = vunpack.c.h.b16 %v245
  %v352 = vunpack.c.l.b16 %v246
  %v353 = vunpack.c.h.b16 %v246
  %v354 = vunpack.c.l.b16 %v247
  %v355 = vunpack.c.h.b16 %v247
  %v356 = vpack.c.b16 %v294, %v292
  %v357 = vpack.c.b16 %v295, %v293
  %v358 = vpack.c.b16 %v298, %v296
  %v359 = vpack.c.b16 %v299, %v297
  %v360 = vpack.c.b16 %v302, %v300
  %v361 = vpack.c.b16 %v303, %v301
  %v362 = vpack.c.b16 %v306, %v304
  %v363 = vpack.c.b16 %v307, %v305
  %v364 = vpack.c.b16 %v310, %v308
  %v365 = vpack.c.b16 %v311, %v309
  %v366 = vpack.c.b16 %v314, %v312
  %v367 = vpack.c.b16 %v315, %v313
  %v368 = vpack.c.b16 %v318, %v316
  %v369 = vpack.c.b16 %v319, %v317
  %v370 = vpack.c.b16 %v322, %v320
  %v371 = vpack.c.b16 %v323, %v321
  %v372 = vpack.c.b16 %v326, %v324
  %v373 = vpack.c.b16 %v327, %v325
  %v374 = vpack.c.b16 %v330, %v328
  %v375 = vpack.c.b16 %v331, %v329
  %v376 = vpack.c.b16 %v334, %v332
  %v377 = vpack.c.b16 %v335, %v333
  %v378 = vpack.c.b16 %v338, %v336
  %v379 = vpack.c.b16 %v339, %v337
  %v380 = vpack.c.b16 %v342, %v340
  %v381 = vpack.c.b16 %v343, %v341
  %v382 = vpack.c.b16 %v346, %v344
  %v383 = vpack.c.b16 %v347, %v345
  %v384 = vpack.c.b16 %v350, %v348
  %v385 = vpack.c.b16 %v351, %v349
  %v386 = vpack.c.b16 %v354, %v352
  %v387 = vpack.c.b16 %v355, %v353
  %420 = vmatprep.subr.bf16.mxu0 %v357
  %421 = vmatpush1.bf16.msra.mxu0 %v356
  %422 = vmatprep.subr.bf16.mxu0 %v359
  %423 = vmatpush1.bf16.msra.mxu0 %v358
  %424 = vmatprep.subr.bf16.mxu0 %v361
  %425 = vmatpush1.bf16.msra.mxu0 %v360
  %426 = vmatprep.subr.bf16.mxu0 %v363
  %427 = vmatpush1.bf16.msra.mxu0 %v362
  %428 = vmatprep.subr.bf16.mxu0 %v365
  %429 = vmatpush1.bf16.msra.mxu0 %v364
  %430 = vmatprep.subr.bf16.mxu0 %v367
  %431 = vmatpush1.bf16.msra.mxu0 %v366
  %432 = vmatprep.subr.bf16.mxu0 %v369
  %433 = vmatpush1.bf16.msra.mxu0 %v368
  %434 = vmatprep.subr.bf16.mxu0 %v371
  %435 = vmatpush1.bf16.msra.mxu0 %v370
  %436 = vmatprep.subr.bf16.mxu0 %v373
  %437 = vmatpush1.bf16.msra.mxu0 %v372
  %438 = vmatprep.subr.bf16.mxu0 %v375
  %439 = vmatpush1.bf16.msra.mxu0 %v374
  %440 = vmatprep.subr.bf16.mxu0 %v377
  %441 = vmatpush1.bf16.msra.mxu0 %v376
  %442 = vmatprep.subr.bf16.mxu0 %v379
  %443 = vmatpush1.bf16.msra.mxu0 %v378
  %444 = vmatprep.subr.bf16.mxu0 %v381
  %445 = vmatpush1.bf16.msra.mxu0 %v380
  %446 = vmatprep.subr.bf16.mxu0 %v383
  %447 = vmatpush1.bf16.msra.mxu0 %v382
  %448 = vmatprep.subr.bf16.mxu0 %v385
  %449 = vmatpush1.bf16.msra.mxu0 %v384
  %450 = vmatprep.subr.bf16.mxu0 %v387
  %451 = vmatpush1.bf16.msra.mxu0 %v386
  %452 = vmatprep.mubr.bf16.mxu0 %v215
  %453 = vmatmul.mubr.bf16.gmra.mrb[0].mxu0 %v214
  %v454 = vpop.f32.mrb[0].mxu0
  %v455 = vadd.f32 %v253, %v454
  %v456 = vpop.f32.mrb[0].mxu0
  %v457 = vadd.f32 %v257, %v456
  %v458 = vpop.f32.mrb[0].mxu0
  %v459 = vpop.f32.mrb[0].mxu0
  %460 = vdwg.mxu0
  %v461 = vmax.f32 %v455, 0.0
  %v462 = vmax.f32 %v457, 0.0
  %v463 = vpack.c.bf16 %v461, %v461
  %v464 = vpack.c.bf16 %v462, %v462
  %v465 = vld [vmem:[%s5] sm:$0xf]
  %v466 = vld [vmem:[%s5 + $0x4] sm:$0xf]
  %v467 = vld [vmem:[%s5 + $0x8] sm:$0xf]
  %v468 = vld [vmem:[%s5 + $0xc] sm:$0xf]
  %v469 = vld [vmem:[%s5 + $0x10] sm:$0xf]
  %v470 = vld [vmem:[%s5 + $0x14] sm:$0xf]
  %v471 = vld [vmem:[%s5 + $0x18] sm:$0xf]
  %v472 = vld [vmem:[%s5 + $0x1c] sm:$0xf]
  %v473 = vld [vmem:[%s5 + $0x20] sm:$0xf]
  %v474 = vld [vmem:[%s5 + $0x24] sm:$0xf]
  %v475 = vld [vmem:[%s5 + $0x28] sm:$0xf]
  %v476 = vld [vmem:[%s5 + $0x2c] sm:$0xf]
  %v477 = vld [vmem:[%s5 + $0x30] sm:$0xf]
  %v478 = vld [vmem:[%s5 + $0x34] sm:$0xf]
  %v479 = vld [vmem:[%s5 + $0x38] sm:$0xf]
  %v480 = vld [vmem:[%s5 + $0x3c] sm:$0xf]
  %v481 = vld [vmem:[%s5 + $0x40] sm:$0xf]
  %v482 = vld [vmem:[%s5 + $0x44] sm:$0xf]
  %v483 = vld [vmem:[%s5 + $0x48] sm:$0xf]
  %v484 = vld [vmem:[%s5 + $0x4c] sm:$0xf]
  %v485 = vld [vmem:[%s5 + $0x50] sm:$0xf]
  %v486 = vld [vmem:[%s5 + $0x54] sm:$0xf]
  %v487 = vld [vmem:[%s5 + $0x58] sm:$0xf]
  %v488 = vld [vmem:[%s5 + $0x5c] sm:$0xf]
  %v489 = vld [vmem:[%s5 + $0x60] sm:$0xf]
  %v490 = vld [vmem:[%s5 + $0x64] sm:$0xf]
  %v491 = vld [vmem:[%s5 + $0x68] sm:$0xf]
  %v492 = vld [vmem:[%s5 + $0x6c] sm:$0xf]
  %v493 = vld [vmem:[%s5 + $0x70] sm:$0xf]
  %v494 = vld [vmem:[%s5 + $0x74] sm:$0xf]
  %v495 = vld [vmem:[%s5 + $0x78] sm:$0xf]
  %v496 = vld [vmem:[%s5 + $0x7c] sm:$0xf]
  %v497 = vld [vmem:[%s6] sm:$0x1]
  %v499 = vlaneseq
  %v500 = vshrl.u32 %v499, 7
  %v501 = vsub.s32 0, %v500
  %v502 = vrot.slane %v497, %v501
  %v536 = vunpack.c.l.b16 %v465
  %v537 = vunpack.c.l.b16 %v466
  %v538 = vunpack.c.l.b16 %v467
  %v539 = vunpack.c.l.b16 %v468
  %v540 = vunpack.c.l.b16 %v469
  %v541 = vunpack.c.l.b16 %v470
  %v542 = vunpack.c.l.b16 %v471
  %v543 = vunpack.c.l.b16 %v472
  %v544 = vunpack.c.l.b16 %v473
  %v545 = vunpack.c.l.b16 %v474
  %v546 = vunpack.c.l.b16 %v475
  %v547 = vunpack.c.l.b16 %v476
  %v548 = vunpack.c.l.b16 %v477
  %v549 = vunpack.c.l.b16 %v478
  %v550 = vunpack.c.l.b16 %v479
  %v551 = vunpack.c.l.b16 %v480
  %v552 = vunpack.c.l.b16 %v481
  %v553 = vunpack.c.l.b16 %v482
  %v554 = vunpack.c.l.b16 %v483
  %v555 = vunpack.c.l.b16 %v484
  %v556 = vunpack.c.l.b16 %v485
  %v557 = vunpack.c.l.b16 %v486
  %v558 = vunpack.c.l.b16 %v487
  %v559 = vunpack.c.l.b16 %v488
  %v560 = vunpack.c.l.b16 %v489
  %v561 = vunpack.c.l.b16 %v490
  %v562 = vunpack.c.l.b16 %v491
  %v563 = vunpack.c.l.b16 %v492
  %v564 = vunpack.c.l.b16 %v493
  %v565 = vunpack.c.l.b16 %v494
  %v566 = vunpack.c.l.b16 %v495
  %v567 = vunpack.c.l.b16 %v496
  %v568 = vpack.c.b16 %v537, %v536
  %v569 = vpack.c.b16 %v539, %v538
  %v570 = vpack.c.b16 %v541, %v540
  %v571 = vpack.c.b16 %v543, %v542
  %v572 = vpack.c.b16 %v545, %v544
  %v573 = vpack.c.b16 %v547, %v546
  %v574 = vpack.c.b16 %v549, %v548
  %v575 = vpack.c.b16 %v551, %v550
  %v576 = vpack.c.b16 %v553, %v552
  %v577 = vpack.c.b16 %v555, %v554
  %v578 = vpack.c.b16 %v557, %v556
  %v579 = vpack.c.b16 %v559, %v558
  %v580 = vpack.c.b16 %v561, %v560
  %v581 = vpack.c.b16 %v563, %v562
  %v582 = vpack.c.b16 %v565, %v564
  %v583 = vpack.c.b16 %v567, %v566
  %600 = vmatprep.subr.bf16.mxu0 0
  %601 = vmatpush1.bf16.msra.mxu0 %v568
  %602 = vmatprep.subr.bf16.mxu0 0
  %603 = vmatpush1.bf16.msra.mxu0 %v569
  %604 = vmatprep.subr.bf16.mxu0 0
  %605 = vmatpush1.bf16.msra.mxu0 %v570
  %606 = vmatprep.subr.bf16.mxu0 0
  %607 = vmatpush1.bf16.msra.mxu0 %v571
  %608 = vmatprep.subr.bf16.mxu0 0
  %609 = vmatpush1.bf16.msra.mxu0 %v572
  %610 = vmatprep.subr.bf16.mxu0 0
  %611 = vmatpush1.bf16.msra.mxu0 %v573
  %612 = vmatprep.subr.bf16.mxu0 0
  %613 = vmatpush1.bf16.msra.mxu0 %v574
  %614 = vmatprep.subr.bf16.mxu0 0
  %615 = vmatpush1.bf16.msra.mxu0 %v575
  %616 = vmatprep.subr.bf16.mxu0 0
  %617 = vmatpush1.bf16.msra.mxu0 %v576
  %618 = vmatprep.subr.bf16.mxu0 0
  %619 = vmatpush1.bf16.msra.mxu0 %v577
  %620 = vmatprep.subr.bf16.mxu0 0
  %621 = vmatpush1.bf16.msra.mxu0 %v578
  %622 = vmatprep.subr.bf16.mxu0 0
  %623 = vmatpush1.bf16.msra.mxu0 %v579
  %624 = vmatprep.subr.bf16.mxu0 0
  %625 = vmatpush1.bf16.msra.mxu0 %v580
  %626 = vmatprep.subr.bf16.mxu0 0
  %627 = vmatpush1.bf16.msra.mxu0 %v581
  %628 = vmatprep.subr.bf16.mxu0 0
  %629 = vmatpush1.bf16.msra.mxu0 %v582
  %630 = vmatprep.subr.bf16.mxu0 0
  %631 = vmatpush1.bf16.msra.mxu0 %v583
  %632 = vmatprep.mubr.bf16.mxu0 %v464
  %633 = vmatmul.mubr.bf16.gmra.mrb[0].mxu0 %v463
  %v634 = vpop.f32.mrb[0].mxu0
  %v635 = vadd.f32 %v502, %v634
  %v636 = vpop.f32.mrb[0].mxu0
  %v637 = vpop.f32.mrb[0].mxu0
  %v638 = vpop.f32.mrb[0].mxu0
  %639 = vdwg.mxu0
  %vm640 = vcmask 31744
  %641 = vst.msk [vmem:[%s7] sm:$0xff] %vm640, %v635
  // Predicated region
  $region30: #{madqn_forward.1} parent=0 // pred_check
    _
  $region31: #{madqn_forward.1} parent=0 // pred_check_branch
    %643 = sbr.rel (0) target = $region33
  $region32: #{madqn_forward.1} parent=0 // pred_region
    _
  $region33: #{madqn_forward.1} parent=0 // pred_fallthru
    _
  // Predicated region
  $region34: #{madqn_forward.1} parent=0 // pred_check
    _
  $region35: #{madqn_forward.1} parent=0 // pred_check_branch
    %645 = sbr.rel (0) target = $region37
  $region36: #{madqn_forward.1} parent=0 // pred_region
    _
  $region37: #{madqn_forward.1} parent=0 // pred_fallthru
    _

</llo_original>
